<compile_context>
chip_gen: v7x
topology: tpu7x:2x2x1
jax: 0.10.0
libtpu: 0.0.40
codegen_flags: <defaults>
</compile_context>

<pallas_src>
import jax
import jax.numpy as jnp
import numpy as np
from jax.experimental import pallas as pl
from jax.experimental.pallas import tpu as pltpu


# ---------------------------------------------------------------------------
# Kernel: LayerNorm + modulate + final Linear on one (1, TN, H) token tile
# ---------------------------------------------------------------------------
def _final_kernel(x_ref, shift_ref, scale_ref, w_ref, b_ref, o_ref):
    x = x_ref[0].astype(jnp.float32)                      # (TN, H)
    shift = shift_ref[0].astype(jnp.float32)              # (1, H)
    scale = scale_ref[0].astype(jnp.float32)               # (1, H)

    # LayerNorm, no affine, eps=1e-6, biased variance.  Two-pass statistics in
    # f32: the tile is already resident, so the second sweep is one extra VPU
    # pass and avoids the cancellation of the E[x^2]-mean^2 form.
    inv_h = jnp.float32(1.0 / x.shape[-1])
    mean = jnp.sum(x, axis=-1, keepdims=True) * inv_h      # (TN, 1)
    xc = x - mean
    var = jnp.sum(xc * xc, axis=-1, keepdims=True) * inv_h
    r = jax.lax.rsqrt(var + 1e-6)                           # (TN, 1)

    # Fused normalize + modulate(x, shift, scale, unsqueeze=True), cast
    # straight to the MXU operand dtype so few full-width f32 temps stay live.
    xm = (xc * (r * (1.0 + scale)) + shift).astype(w_ref.dtype)   # (TN, H)

    # Final linear on the MXU, f32 accumulation.
    y = jnp.dot(xm, w_ref[...], preferred_element_type=jnp.float32)   # (TN, O)
    o_ref[0] = (y + b_ref[...].astype(jnp.float32)).astype(o_ref.dtype)


# ---------------------------------------------------------------------------
# Wrapper
# ---------------------------------------------------------------------------
def dit_final_layer(x, t, params, *, tile_n=None, mxu_dtype=jnp.bfloat16,
                    out_dtype=None):
    """x: (B, N, H), t: (B, H)  ->  (B, N, patch*patch*out_channels)."""
    B, N, H = x.shape
    w_ada, b_ada = params["w_ada"], params["b_ada"]
    w_lin, b_lin = params["w_lin"], params["b_lin"]
    O = w_lin.shape[1]
    out_dtype = x.dtype if out_dtype is None else out_dtype

    # adaLN modulation: SiLU(t) @ W_ada + b_ada.  A (B,H)x(H,2H) matmul is
    # microseconds of work; keep it in plain JAX and split shift/scale at the
    # producer so the hot kernel has no lane-offset slicing.  Reshaped to
    # (B, 1, H) so the BlockSpec trailing dims are full-extent.
    tf = t.astype(jnp.float32)
    mod = (tf * jax.nn.sigmoid(tf)) @ w_ada.astype(jnp.float32) \
        + b_ada.astype(jnp.float32)                          # (B, 2H)
    shift = mod[:, :H].reshape(B, 1, H)
    scale = mod[:, H:].reshape(B, 1, H)

    # Explicit matmul precision policy: cast the weight once here (bf16 by
    # default -> native MXU path, half the weight DMA).  Bias stays f32.
    w_mm = w_lin.astype(mxu_dtype)
    b_mm = b_lin.reshape(1, O).astype(jnp.float32)

    # Token-dimension tiling.  No padding: grid = (B, cdiv(N, tn)); the ragged
    # last block is masked by Pallas (all math is strictly per-row).
    if tile_n is None:
        tile_n = 1024 if x.dtype.itemsize <= 2 else 512
    if N <= tile_n:
        tn = N                                               # block == full dim
        if B == 1 and N >= 16:
            # v7x megacore: guarantee >=2 grid steps so both TCs get work.
            tn = ((pl.cdiv(N, 2) + 7) // 8) * 8
    else:
        tn = max(8, (tile_n // 8) * 8)                        # 8-sublane aligned
    n_tiles = pl.cdiv(N, tn)

    # Explicit VMEM budget: double-buffered x + out tiles, resident weight,
    # generous allowance for in-kernel f32 temps.  Clamped to 48 MiB so it
    # also fits v7x's 64 MiB physical VMEM.
    need = (2 * tn * H * x.dtype.itemsize
            + 2 * tn * O * jnp.dtype(out_dtype).itemsize
            + H * O * jnp.dtype(mxu_dtype).itemsize
            + 4 * tn * H * 4)
    vmem_limit = int(min(max(need + (8 << 20), 32 << 20), 48 << 20))

    out = pl.pallas_call(
        _final_kernel,
        out_shape=jax.ShapeDtypeStruct((B, N, O), out_dtype),
        grid_spec=pltpu.PrefetchScalarGridSpec(
            num_scalar_prefetch=0,
            grid=(B, n_tiles),
            in_specs=[
                pl.BlockSpec((1, tn, H), lambda b, n: (b, n, 0)),   # x tile
                pl.BlockSpec((1, 1, H), lambda b, n: (b, 0, 0)),    # shift row
                pl.BlockSpec((1, 1, H), lambda b, n: (b, 0, 0)),    # scale row
                pl.BlockSpec((H, O), lambda b, n: (0, 0)),          # W_lin (resident)
                pl.BlockSpec((1, O), lambda b, n: (0, 0)),          # b_lin (resident)
            ],
            out_specs=pl.BlockSpec((1, tn, O), lambda b, n: (b, n, 0)),
        ),
        # No reduction axis: every output block is written exactly once, so
        # both grid axes can be sharded across TensorCores (v7x megacore).
        compiler_params=pltpu.CompilerParams(
            dimension_semantics=("parallel", "parallel"),
            vmem_limit_bytes=vmem_limit),
    )(x, shift, scale, w_mm, b_mm)

    return out


# ---------------------------------------------------------------------------
# Pure-JAX reference (for correctness check)
# ---------------------------------------------------------------------------
def dit_final_layer_ref(x, t, params):
    s = t * jax.nn.sigmoid(t)
    mod = s @ params["w_ada"] + params["b_ada"]
    H = x.shape[-1]
    shift, scale = mod[:, :H], mod[:, H:]
    mean = jnp.mean(x, axis=-1, keepdims=True)
    var = jnp.mean(jnp.square(x - mean), axis=-1, keepdims=True)
    xn = (x - mean) / jnp.sqrt(var + 1e-6)
    xm = xn * (1.0 + scale[:, None, :]) + shift[:, None, :]
    return xm @ params["w_lin"] + params["b_lin"]


def _make_case(key, B, N, H, O):
    k_x, k_t, k_wa, k_ba, k_wl, k_bl = jax.random.split(key, 6)
    x = jax.random.normal(k_x, (B, N, H), dtype=jnp.float32)
    t = jax.random.normal(k_t, (B, H), dtype=jnp.float32)
    params = {
        "w_ada": jax.random.normal(k_wa, (H, 2 * H), dtype=jnp.float32) * 0.05,
        "b_ada": jax.random.normal(k_ba, (2 * H,), dtype=jnp.float32) * 0.05,
        "w_lin": jax.random.normal(k_wl, (H, O), dtype=jnp.float32) * 0.05,
        "b_lin": jax.random.normal(k_bl, (O,), dtype=jnp.float32) * 0.05,
    }
    return x, t, params


if __name__ == "__main__":
    key = jax.random.PRNGKey(0)
    k1, k2 = jax.random.split(key)

    # --- Case 1: small, module-consistent shapes; f32 MXU path, tight tol ---
    B, N, hidden_size = 2, 8, 32
    patch_size, out_channels = 2, 4
    O = patch_size * patch_size * out_channels              # 16
    x, t, params = _make_case(k1, B, N, hidden_size, O)

    out = jax.block_until_ready(
        dit_final_layer(x, t, params, mxu_dtype=jnp.float32))
    ref = jax.block_until_ready(dit_final_layer_ref(x, t, params))
    np.testing.assert_allclose(np.asarray(out), np.asarray(ref),
                               rtol=1e-4, atol=1e-4)

    # --- Case 1b: default bf16 MXU policy (looser tolerance) ---
    out_bf = jax.block_until_ready(dit_final_layer(x, t, params))
    np.testing.assert_allclose(np.asarray(out_bf), np.asarray(ref),
                               rtol=3e-2, atol=3e-2)

    # --- Case 2: ragged N -> last token tile is partially out of bounds
    #     (exercises the masked read/write path; no wrapper-side padding) ---
    B2, N2, H2 = 2, 1100, 128                                # 1100 % 512 != 0
    x2, t2, params2 = _make_case(k2, B2, N2, H2, O)
    out2 = jax.block_until_ready(dit_final_layer(x2, t2, params2, tile_n=512))
    ref2 = jax.block_until_ready(dit_final_layer_ref(x2, t2, params2))
    np.testing.assert_allclose(np.asarray(out2), np.asarray(ref2),
                               rtol=3e-2, atol=3e-2)

    print("KERNEL_OK")
</pallas_src>

<mosaic_0001>
module attributes {stable_mosaic.version = 11 : i64} {
  func.func @_final_kernel(%arg0: i32, %arg1: i32, %arg2: memref<1x8x32xf32, #tpu.memory_space<vmem>>, %arg3: memref<1x1x32xf32, #tpu.memory_space<vmem>>, %arg4: memref<1x1x32xf32, #tpu.memory_space<vmem>>, %arg5: memref<32x16xf32, #tpu.memory_space<vmem>>, %arg6: memref<1x16xf32, #tpu.memory_space<vmem>>, %arg7: memref<1x8x16xf32, #tpu.memory_space<vmem>>) attributes {dimension_semantics = [#tpu.dimension_semantics<parallel>, #tpu.dimension_semantics<parallel>], iteration_bounds = array<i64: 2, 1>, scalar_prefetch = 0 : i64, scratch_operands = 0 : i64, tpu.core_type = #tpu.core_type<tc>, window_params = [{transform_indices = @transform_0, window_bounds = array<i64: 1, 8, 32>}, {transform_indices = @transform_1, window_bounds = array<i64: 1, 1, 32>}, {transform_indices = @transform_2, window_bounds = array<i64: 1, 1, 32>}, {pipeline_mode = #tpu.pipeline_mode<synchronous>, transform_indices = @transform_3, window_bounds = array<i64: 32, 16>}, {pipeline_mode = #tpu.pipeline_mode<synchronous>, transform_indices = @transform_4, window_bounds = array<i64: 1, 16>}, {transform_indices = @transform_5, window_bounds = array<i64: 1, 8, 16>}]} {
    %c0 = arith.constant 0 : index
    %c0_0 = arith.constant 0 : index
    %c0_1 = arith.constant 0 : index
    %0 = vector.load %arg2[%c0, %c0_0, %c0_1] : memref<1x8x32xf32, #tpu.memory_space<vmem>>, vector<1x8x32xf32>
    %1 = vector.shape_cast %0 : vector<1x8x32xf32> to vector<8x32xf32>
    %c0_2 = arith.constant 0 : index
    %c0_3 = arith.constant 0 : index
    %c0_4 = arith.constant 0 : index
    %2 = vector.load %arg3[%c0_2, %c0_3, %c0_4] : memref<1x1x32xf32, #tpu.memory_space<vmem>>, vector<1x1x32xf32>
    %3 = vector.shape_cast %2 : vector<1x1x32xf32> to vector<1x32xf32>
    %c0_5 = arith.constant 0 : index
    %c0_6 = arith.constant 0 : index
    %c0_7 = arith.constant 0 : index
    %4 = vector.load %arg4[%c0_5, %c0_6, %c0_7] : memref<1x1x32xf32, #tpu.memory_space<vmem>>, vector<1x1x32xf32>
    %5 = vector.shape_cast %4 : vector<1x1x32xf32> to vector<1x32xf32>
    %cst = arith.constant dense<0.000000e+00> : vector<8xf32>
    %6 = vector.multi_reduction <add>, %1, %cst [1] : vector<8x32xf32> to vector<8xf32>
    %7 = vector.shape_cast %6 : vector<8xf32> to vector<8x1xf32>
    %cst_8 = arith.constant 3.125000e-02 : f32
    %8 = vector.broadcast %cst_8 : f32 to vector<8x1xf32>
    %9 = arith.mulf %7, %8 : vector<8x1xf32>
    %10 = vector.broadcast %9 : vector<8x1xf32> to vector<8x32xf32>
    %11 = arith.subf %1, %10 : vector<8x32xf32>
    %12 = arith.mulf %11, %11 : vector<8x32xf32>
    %cst_9 = arith.constant dense<0.000000e+00> : vector<8xf32>
    %13 = vector.multi_reduction <add>, %12, %cst_9 [1] : vector<8x32xf32> to vector<8xf32>
    %14 = vector.shape_cast %13 : vector<8xf32> to vector<8x1xf32>
    %cst_10 = arith.constant 3.125000e-02 : f32
    %15 = vector.broadcast %cst_10 : f32 to vector<8x1xf32>
    %16 = arith.mulf %14, %15 : vector<8x1xf32>
    %cst_11 = arith.constant 9.99999997E-7 : f32
    %17 = vector.broadcast %cst_11 : f32 to vector<8x1xf32>
    %18 = arith.addf %16, %17 : vector<8x1xf32>
    %19 = math.rsqrt %18 : vector<8x1xf32>
    %cst_12 = arith.constant 1.000000e+00 : f32
    %20 = vector.broadcast %cst_12 : f32 to vector<1x32xf32>
    %21 = arith.addf %20, %5 : vector<1x32xf32>
    %22 = vector.broadcast %19 : vector<8x1xf32> to vector<8x32xf32>
    %23 = vector.broadcast %21 : vector<1x32xf32> to vector<8x32xf32>
    %24 = arith.mulf %22, %23 : vector<8x32xf32>
    %25 = arith.mulf %11, %24 : vector<8x32xf32>
    %26 = vector.broadcast %3 : vector<1x32xf32> to vector<8x32xf32>
    %27 = arith.addf %25, %26 : vector<8x32xf32>
    %c0_13 = arith.constant 0 : index
    %c0_14 = arith.constant 0 : index
    %28 = vector.load %arg5[%c0_13, %c0_14] : memref<32x16xf32, #tpu.memory_space<vmem>>, vector<32x16xf32>
    %cst_15 = arith.constant dense<0.000000e+00> : vector<8x16xf32>
    %29 = tpu.matmul %27, %28, %cst_15 {dimension_numbers = #tpu.dot_dimension_numbers<[1], [0], [0], [1], [0, 0, 1, 1], [], []>} : vector<8x32xf32>, vector<32x16xf32>, vector<8x16xf32> -> vector<8x16xf32>
    %c0_16 = arith.constant 0 : index
    %c0_17 = arith.constant 0 : index
    %30 = vector.load %arg6[%c0_16, %c0_17] : memref<1x16xf32, #tpu.memory_space<vmem>>, vector<1x16xf32>
    %31 = vector.broadcast %30 : vector<1x16xf32> to vector<8x16xf32>
    %32 = arith.addf %29, %31 : vector<8x16xf32>
    %c0_18 = arith.constant 0 : index
    %c0_19 = arith.constant 0 : index
    %c0_20 = arith.constant 0 : index
    %33 = vector.load %arg7[%c0_18, %c0_19, %c0_20] : memref<1x8x16xf32, #tpu.memory_space<vmem>>, vector<1x8x16xf32>
    %34 = vector.shape_cast %33 : vector<1x8x16xf32> to vector<8x16xf32>
    %35 = vector.shape_cast %32 : vector<8x16xf32> to vector<1x8x16xf32>
    tpu.vector_store %arg7[%c0_18, %c0_19, %c0_20], %35 {strides = array<i32>} : memref<1x8x16xf32, #tpu.memory_space<vmem>>, vector<1x8x16xf32>,
    return
  }
  func.func @transform_0(%arg0: i32, %arg1: i32) -> (i32, i32, i32) {
    %c0_i32 = arith.constant 0 : i32
    %c0_i32_0 = arith.constant 0 : i32
    return %arg0, %arg1, %c0_i32 : i32, i32, i32
  }
  func.func @transform_1(%arg0: i32, %arg1: i32) -> (i32, i32, i32) {
    %c0_i32 = arith.constant 0 : i32
    %c0_i32_0 = arith.constant 0 : i32
    %c0_i32_1 = arith.constant 0 : i32
    return %arg0, %c0_i32, %c0_i32_0 : i32, i32, i32
  }
  func.func @transform_2(%arg0: i32, %arg1: i32) -> (i32, i32, i32) {
    %c0_i32 = arith.constant 0 : i32
    %c0_i32_0 = arith.constant 0 : i32
    %c0_i32_1 = arith.constant 0 : i32
    return %arg0, %c0_i32, %c0_i32_0 : i32, i32, i32
  }
  func.func @transform_3(%arg0: i32, %arg1: i32) -> (i32, i32) {
    %c0_i32 = arith.constant 0 : i32
    %c0_i32_0 = arith.constant 0 : i32
    %c0_i32_1 = arith.constant 0 : i32
    return %c0_i32, %c0_i32_0 : i32, i32
  }
  func.func @transform_4(%arg0: i32, %arg1: i32) -> (i32, i32) {
    %c0_i32 = arith.constant 0 : i32
    %c0_i32_0 = arith.constant 0 : i32
    %c0_i32_1 = arith.constant 0 : i32
    return %c0_i32, %c0_i32_0 : i32, i32
  }
  func.func @transform_5(%arg0: i32, %arg1: i32) -> (i32, i32, i32) {
    %c0_i32 = arith.constant 0 : i32
    %c0_i32_0 = arith.constant 0 : i32
    return %arg0, %arg1, %c0_i32 : i32, i32, i32
  }
}

</mosaic_0001>

<llo_original>
// kernel: tpu_custom_call.1
$region0: #{tpu_custom_call.1}
  #allocation0 [shape = 'u32[]', space=smem, size = 0x4, offset = 0x4, fixed_abs, tag = 'smem constant byte address 0x4 - core index']
  #allocation1 [shape = 'u32[144,128]{1,0:T(1,128)}', space=vmem, size = 0x12000, scoped, tag = 'internal scratch']
  %s0 = inlined_call_operand.vmem [shape: f32[2,8,32], index: 0, kind: input, shape index: {}]
  %s1 = inlined_call_operand.vmem [shape: f32[2,1,32], index: 1, kind: input, shape index: {}]
  %s2 = inlined_call_operand.vmem [shape: f32[2,1,32], index: 2, kind: input, shape index: {}]
  %s3 = inlined_call_operand.vmem [shape: f32[32,16], index: 3, kind: input, shape index: {}]
  %s4 = inlined_call_operand.vmem [shape: f32[1,16], index: 4, kind: input, shape index: {}]
  %s5 = inlined_call_operand.hbm [shape: f32[2,8,16], index: 5, kind: output, shape index: {}]
  %s6 = sld [smem:[#allocation0]]
  $region53: #{tpu_custom_call.1} parent=0
    _
  %s8 = ssub.s32 1, %s6
  %s9 = scalar_select 0, %s8, %s6
  $region1: #{tpu_custom_call.1} parent=0
    #allocation2 [shape = 'u8[8192]{0}', space=vmem, size = 0x2000, scoped, tag = 'output window, operand 0']
    #allocation3 [shape = 's32[2]{0}', space=sflag, size = 0x8, scoped, tag = 'scoped memory for tpu_custom_call.1']
    %10 = vsyncpa [#allocation3], 0
    %s11 = scalar_lea.sflag [#allocation3], 1
    %12 = vsyncpa %s11, 0
    loop: start=0, step=1, limit=4
    $region2: #{tpu_custom_call.1} parent=1 // loop_pre_header
      _
    $region3: #{tpu_custom_call.1} parent=1 // loop_header
      %s14 = sphi 0, %s18
      %p15 = scmp.ge.s32.totalorder %s14, 4
      %s21 = sphi 0, %s33
      %s22 = sphi 0, %s29
      %s23 = sphi 0, %s21
      %s24 = sphi 0, %s22
      %s25 = sphi 0, %s23
      %s26 = sphi 0, %s24
      %s38 = sphi 0, %s40
      %s41 = sphi 0, %s38
      %s42 = sphi 0, %s41
      %s58 = sphi 0, %s42
      %s64 = sphi 0, %s66
      %s67 = sphi 0, %s64
      %s68 = sphi 0, %s67
      %s84 = sphi 0, %s68
      %s90 = sphi 0, %s92
      %s93 = sphi 0, %s90
      %s94 = sphi 0, %s93
      %s110 = sphi 0, %s94
      %s114 = sphi 0, %s114
      %s116 = sphi 0, %s114
      %s117 = sphi 0, %s116
      %s131 = sphi 0, %s117
      %s135 = sphi 0, %s135
      %s137 = sphi 0, %s135
      %s138 = sphi 0, %s137
      %s152 = sphi 0, %s138
      %s160 = sphi 0, %s162
      %s163 = sphi 0, %s160
      %s164 = sphi 0, %s163
      %s180 = sphi 0, %s164
    $region4: #{tpu_custom_call.1} parent=1 // loop_header_branch
      %17 = sbr.rel (%p15) target = $region8
    $region5: #{tpu_custom_call.1} parent=1 // loop_body
      %s19 = ssub.s32 %s14, 1
      %s20 = ssub.s32 %s14, 2
      %s27 = sadd.s32 1, %s22
      %p28 = scmp.ge.s32.totalorder %s27, 1
      %s29 = scalar_select %p28, 0, %s27
      %s30 = sadd.s32 1, %s21
      %s31 = scalar_select %p28, %s30, %s21
      %p32 = scmp.ge.s32.totalorder %s31, 2
      %s33 = scalar_select %p32, 0, %s31
      %s34 = ssub.s32 %s21, %s33
      %s35 = ssub.s32 %s22, %s29
      %s36 = sor.u32 %s34, %s35
      %p37 = scmp.eq.s32.totalorder %s36, 0
      %s39 = sadd.s32 %s38, 1
      %s40 = scalar_select %p37, %s38, %s39
      %p43 = pneg %p37
      %p44 = scmp.eq.s32.totalorder %s14, 1
      %p45 = por %p43, %p44
      %p46 = scmp.ne.s32.totalorder %s38, %s41
      %p47 = scmp.eq.s32.totalorder %s14, 0
      %p48 = por %p46, %p47
      %p49 = scmp.ne.s32.totalorder %s38, %s41
      %p50 = scmp.eq.s32.totalorder %s19, 1
      %p51 = por %p49, %p50
      %p52 = scmp.ne.s32.totalorder %s41, %s42
      %p53 = scmp.eq.s32.totalorder %s19, 0
      %p54 = por %p52, %p53
      %p55 = scmp.ne.s32.totalorder %s41, %s42
      %p56 = scmp.eq.s32.totalorder %s20, 1
      %p57 = por %p55, %p56
      %p59 = scmp.ne.s32.totalorder %s42, %s58
      %p60 = scmp.eq.s32.totalorder %s20, 0
      %p61 = por %p59, %p60
      %s62 = ssub.s32 %s21, %s33
      %p63 = scmp.eq.s32.totalorder %s62, 0
      %s65 = sadd.s32 %s64, 1
      %s66 = scalar_select %p63, %s64, %s65
      %p69 = pneg %p63
      %p70 = scmp.eq.s32.totalorder %s14, 1
      %p71 = por %p69, %p70
      %p72 = scmp.ne.s32.totalorder %s64, %s67
      %p73 = scmp.eq.s32.totalorder %s14, 0
      %p74 = por %p72, %p73
      %p75 = scmp.ne.s32.totalorder %s64, %s67
      %p76 = scmp.eq.s32.totalorder %s19, 1
      %p77 = por %p75, %p76
      %p78 = scmp.ne.s32.totalorder %s67, %s68
      %p79 = scmp.eq.s32.totalorder %s19, 0
      %p80 = por %p78, %p79
      %p81 = scmp.ne.s32.totalorder %s67, %s68
      %p82 = scmp.eq.s32.totalorder %s20, 1
      %p83 = por %p81, %p82
      %p85 = scmp.ne.s32.totalorder %s68, %s84
      %p86 = scmp.eq.s32.totalorder %s20, 0
      %p87 = por %p85, %p86
      %s88 = ssub.s32 %s21, %s33
      %p89 = scmp.eq.s32.totalorder %s88, 0
      %s91 = sadd.s32 %s90, 1
      %s92 = scalar_select %p89, %s90, %s91
      %p95 = pneg %p89
      %p96 = scmp.eq.s32.totalorder %s14, 1
      %p97 = por %p95, %p96
      %p98 = scmp.ne.s32.totalorder %s90, %s93
      %p99 = scmp.eq.s32.totalorder %s14, 0
      %p100 = por %p98, %p99
      %p101 = scmp.ne.s32.totalorder %s90, %s93
      %p102 = scmp.eq.s32.totalorder %s19, 1
      %p103 = por %p101, %p102
      %p104 = scmp.ne.s32.totalorder %s93, %s94
      %p105 = scmp.eq.s32.totalorder %s19, 0
      %p106 = por %p104, %p105
      %p107 = scmp.ne.s32.totalorder %s93, %s94
      %p108 = scmp.eq.s32.totalorder %s20, 1
      %p109 = por %p107, %p108
      %p111 = scmp.ne.s32.totalorder %s94, %s110
      %p112 = scmp.eq.s32.totalorder %s20, 0
      %p113 = por %p111, %p112
      %s115 = sadd.s32 %s114, 1
      %p118 = scmp.eq.s32.totalorder %s14, 1
      %p119 = scmp.ne.s32.totalorder %s114, %s116
      %p120 = scmp.eq.s32.totalorder %s14, 0
      %p121 = por %p119, %p120
      %p122 = scmp.ne.s32.totalorder %s114, %s116
      %p123 = scmp.eq.s32.totalorder %s19, 1
      %p124 = por %p122, %p123
      %p125 = scmp.ne.s32.totalorder %s116, %s117
      %p126 = scmp.eq.s32.totalorder %s19, 0
      %p127 = por %p125, %p126
      %p128 = scmp.ne.s32.totalorder %s116, %s117
      %p129 = scmp.eq.s32.totalorder %s20, 1
      %p130 = por %p128, %p129
      %p132 = scmp.ne.s32.totalorder %s117, %s131
      %p133 = scmp.eq.s32.totalorder %s20, 0
      %p134 = por %p132, %p133
      %s136 = sadd.s32 %s135, 1
      %p139 = scmp.eq.s32.totalorder %s14, 1
      %p140 = scmp.ne.s32.totalorder %s135, %s137
      %p141 = scmp.eq.s32.totalorder %s14, 0
      %p142 = por %p140, %p141
      %p143 = scmp.ne.s32.totalorder %s135, %s137
      %p144 = scmp.eq.s32.totalorder %s19, 1
      %p145 = por %p143, %p144
      %p146 = scmp.ne.s32.totalorder %s137, %s138
      %p147 = scmp.eq.s32.totalorder %s19, 0
      %p148 = por %p146, %p147
      %p149 = scmp.ne.s32.totalorder %s137, %s138
      %p150 = scmp.eq.s32.totalorder %s20, 1
      %p151 = por %p149, %p150
      %p153 = scmp.ne.s32.totalorder %s138, %s152
      %p154 = scmp.eq.s32.totalorder %s20, 0
      %p155 = por %p153, %p154
      %s156 = ssub.s32 %s21, %s33
      %s157 = ssub.s32 %s22, %s29
      %s158 = sor.u32 %s156, %s157
      %p159 = scmp.eq.s32.totalorder %s158, 0
      %s161 = sadd.s32 %s160, 1
      %s162 = scalar_select %p159, %s160, %s161
      %p165 = pneg %p159
      %p166 = scmp.eq.s32.totalorder %s14, 1
      %p167 = por %p165, %p166
      %p168 = scmp.ne.s32.totalorder %s160, %s163
      %p169 = scmp.eq.s32.totalorder %s14, 0
      %p170 = por %p168, %p169
      %p171 = scmp.ne.s32.totalorder %s160, %s163
      %p172 = scmp.eq.s32.totalorder %s19, 1
      %p173 = por %p171, %p172
      %p174 = scmp.ne.s32.totalorder %s163, %s164
      %p175 = scmp.eq.s32.totalorder %s19, 0
      %p176 = por %p174, %p175
      %p177 = scmp.ne.s32.totalorder %s163, %s164
      %p178 = scmp.eq.s32.totalorder %s20, 1
      %p179 = por %p177, %p178
      %p181 = scmp.ne.s32.totalorder %s164, %s180
      %p182 = scmp.eq.s32.totalorder %s20, 0
      %p183 = por %p181, %p182
      %p184 = scmp.le.s32.totalorder 1, %s14
      %p185 = scmp.lt.s32.totalorder %s14, 3
      %p186 = pnand %p184, %p185
      %p187 = pneg %p186
      // Predicated region
      $region9: #{tpu_custom_call.1} parent=5 // pred_check
        _
      $region10: #{tpu_custom_call.1} parent=5 // pred_check_branch
        %189 = sbr.rel (%p186) target = $region12
      $region11: #{tpu_custom_call.1} parent=5 // pred_region
        %s190 = ssub.s32 %s14, 1
        // Predicated region
        $region13: #{tpu_custom_call.1} parent=11 // pred_check
          %p191 = pneg %p127
        $region14: #{tpu_custom_call.1} parent=11 // pred_check_branch
          %193 = sbr.rel (%p191) target = $region16
        $region15: #{tpu_custom_call.1} parent=11 // pred_region
          _
        $region16: #{tpu_custom_call.1} parent=11 // pred_fallthru
          _
        // Predicated region
        $region17: #{tpu_custom_call.1} parent=11 // pred_check
          %p194 = pneg %p148
        $region18: #{tpu_custom_call.1} parent=11 // pred_check_branch
          %196 = sbr.rel (%p194) target = $region20
        $region19: #{tpu_custom_call.1} parent=11 // pred_region
          _
        $region20: #{tpu_custom_call.1} parent=11 // pred_fallthru
          _
      $region12: #{tpu_custom_call.1} parent=5 // pred_fallthru
        _
      %p197 = scmp.lt.s32.totalorder %s14, 2
      // Predicated region
      $region21: #{tpu_custom_call.1} parent=5 // pred_check
        %p198 = pneg %p197
      $region22: #{tpu_custom_call.1} parent=5 // pred_check_branch
        %200 = sbr.rel (%p198) target = $region24
      $region23: #{tpu_custom_call.1} parent=5 // pred_region
        // Predicated region
        $region25: #{tpu_custom_call.1} parent=23 // pred_check
          %p201 = pneg %p48
        $region26: #{tpu_custom_call.1} parent=23 // pred_check_branch
          %203 = sbr.rel (%p201) target = $region28
        $region27: #{tpu_custom_call.1} parent=23 // pred_region
          %p204 = scmp.lt.s32.totalorder %s21, 1
          %s205 = scalar_select %p204, %s21, 1
          %p206 = scmp.lt.s32.totalorder %s22, 0
          %s207 = scalar_select %p206, %s22, 0
          %s208 = sadd.s32 %s207, %s205
          %s209 = smul.addr %s208, 8
          %s210 = scalar_lea.vmem %s0, %s209
        $region28: #{tpu_custom_call.1} parent=23 // pred_fallthru
          _
        // Predicated region
        $region29: #{tpu_custom_call.1} parent=23 // pred_check
          %p211 = pneg %p74
        $region30: #{tpu_custom_call.1} parent=23 // pred_check_branch
          %213 = sbr.rel (%p211) target = $region32
        $region31: #{tpu_custom_call.1} parent=23 // pred_region
          %p214 = scmp.lt.s32.totalorder %s21, 1
          %s215 = scalar_select %p214, %s21, 1
          %s216 = scalar_lea.vmem %s1, %s215
        $region32: #{tpu_custom_call.1} parent=23 // pred_fallthru
          _
        // Predicated region
        $region33: #{tpu_custom_call.1} parent=23 // pred_check
          %p217 = pneg %p100
        $region34: #{tpu_custom_call.1} parent=23 // pred_check_branch
          %219 = sbr.rel (%p217) target = $region36
        $region35: #{tpu_custom_call.1} parent=23 // pred_region
          %p220 = scmp.lt.s32.totalorder %s21, 1
          %s221 = scalar_select %p220, %s21, 1
          %s222 = scalar_lea.vmem %s2, %s221
        $region36: #{tpu_custom_call.1} parent=23 // pred_fallthru
          _
      $region24: #{tpu_custom_call.1} parent=5 // pred_fallthru
        _
      %p223 = scmp.le.s32.totalorder 1, %s14
      %p224 = scmp.lt.s32.totalorder %s14, 3
      %p225 = pnand %p223, %p224
      %p226 = pneg %p225
      // Predicated region
      $region37: #{tpu_custom_call.1} parent=5 // pred_check
        _
      $region38: #{tpu_custom_call.1} parent=5 // pred_check_branch
        %228 = sbr.rel (%p225) target = $region40
      $region39: #{tpu_custom_call.1} parent=5 // pred_region
        %s229 = ssub.s32 %s14, 1
        %p230 = scmp.lt.s32.totalorder %s23, 1
        %s231 = scalar_select %p230, %s23, 1
        %p232 = scmp.lt.s32.totalorder %s24, 0
        %s233 = scalar_select %p232, %s24, 0
        %s234 = sadd.s32 %s233, %s231
        %s235 = smul.addr %s234, 8
        %s236 = scalar_lea.vmem %s0, %s235
        %p237 = pneg %p54
        %p238 = pneg %p51
        %p239 = scmp.lt.s32.totalorder %s23, 1
        %s240 = scalar_select %p239, %s23, 1
        %s241 = scalar_lea.vmem %s1, %s240
        %p242 = pneg %p80
        %p243 = pneg %p77
        %p244 = scmp.lt.s32.totalorder %s23, 1
        %s245 = scalar_select %p244, %s23, 1
        %s246 = scalar_lea.vmem %s2, %s245
        %p247 = pneg %p106
        %p248 = pneg %p103
        %p249 = pneg %p127
        %p250 = pneg %p124
        %p251 = pneg %p148
        %p252 = pneg %p145
        %p253 = pneg %p176
        %p254 = pneg %p173
        %s255 = sand.u32 %s163, 1
        %s256 = scalar_lea.sflag [#allocation3], %s255
        %s257 = sand.u32 %s163, 1
        %s258 = smul.addr %s257, 8
        %s259 = scalar_lea.vmem [#allocation2], %s258
        %p260 = scmp.lt.s32.totalorder %s23, 1
        %s261 = scalar_select %p260, %s23, 1
        %p262 = scmp.lt.s32.totalorder %s24, 0
        %s263 = scalar_select %p262, %s24, 0
        %s264 = sadd.s32 %s263, %s261
        %s265 = smul.addr %s264, 8
        %s266 = scalar_lea.vmem %s0, %s265
        %p267 = scmp.lt.s32.totalorder %s23, 1
        %s268 = scalar_select %p267, %s23, 1
        %s269 = scalar_lea.vmem %s1, %s268
        %p270 = scmp.lt.s32.totalorder %s23, 1
        %s271 = scalar_select %p270, %s23, 1
        %s272 = scalar_lea.vmem %s2, %s271
        %v273 = vld [vmem:[%s266] sm:$0xff]
        %v274 = vld [vmem:[%s269] sm:$0x1]
        %v275 = vld [vmem:[%s272] sm:$0x1]
        %vm276 = vcmask 261120
        %v277 = vsel %vm276, %v273, 0.0
        %278 = vadd.xlane.f32.xlu0 %v277
        %v279 = vpop.xlane.xlu0 %278
        %v280 = vmul.f32 %v279, 0.03125
        %v281 = vsub.f32 %v273, %v280
        %v282 = vmul.f32 %v281, %v281
        %v283 = vsel %vm276, %v282, 0.0
        %284 = vadd.xlane.f32.xlu0 %v283
        %v285 = vpop.xlane.xlu0 %284
        %v286 = vmul.f32 %v285, 0.03125
        %v287 = vadd.f32 %v286, 1e-06
        %v288 = vrsqrt.pop %v287
        %v289 = vadd.f32 %v275, 1.0
        %v291 = vlaneseq
        %v292 = vshrl.u32 %v291, 7
        %v293 = vsub.s32 0, %v292
        %v294 = vrot.slane %v289, %v293
        %v296 = vmul.f32 %v288, %v294
        %v297 = vmul.f32 %v281, %v296
        %v299 = vlaneseq
        %v300 = vshrl.u32 %v299, 7
        %v301 = vsub.s32 0, %v300
        %v302 = vrot.slane %v274, %v301
        %v304 = vadd.f32 %v297, %v302
        %v305 = vld [vmem:[%s3] sm:$0xff]
        %v306 = vld [vmem:[%s3 + $0x8] sm:$0xff]
        %v307 = vld [vmem:[%s3 + $0x10] sm:$0xff]
        %v308 = vld [vmem:[%s3 + $0x18] sm:$0xff]
        %v309 = vld [vmem:[%s4] sm:$0x1]
        %v311 = vlaneseq
        %v312 = vshrl.u32 %v311, 7
        %v313 = vsub.s32 0, %v312
        %v314 = vrot.slane %v309, %v313
        %v317 = vsel %vm276, %v304, 0
        %319 = vmatprep.subr.mxu0 0.0
        %320 = vmatpush1.msra.mxu0 %v305
        %321 = vmatprep.subr.mxu0 0.0
        %322 = vmatpush1.msra.mxu0 %v306
        %323 = vmatprep.subr.mxu0 0.0
        %324 = vmatpush1.msra.mxu0 %v307
        %325 = vmatprep.subr.mxu0 0.0
        %326 = vmatpush1.msra.mxu0 %v308
        %327 = vmatprep.subr.mxu0 0.0
        %328 = vmatpush1.msra.mxu0 0.0
        %329 = vmatprep.subr.mxu0 0.0
        %330 = vmatpush1.msra.mxu0 0.0
        %331 = vmatprep.subr.mxu0 0.0
        %332 = vmatpush1.msra.mxu0 0.0
        %333 = vmatprep.subr.mxu0 0.0
        %334 = vmatpush1.msra.mxu0 0.0
        %335 = vmatprep.subr.mxu0 0.0
        %336 = vmatpush1.msra.mxu0 0.0
        %337 = vmatprep.subr.mxu0 0.0
        %338 = vmatpush1.msra.mxu0 0.0
        %339 = vmatprep.subr.mxu0 0.0
        %340 = vmatpush1.msra.mxu0 0.0
        %341 = vmatprep.subr.mxu0 0.0
        %342 = vmatpush1.msra.mxu0 0.0
        %343 = vmatprep.subr.mxu0 0.0
        %344 = vmatpush1.msra.mxu0 0.0
        %345 = vmatprep.subr.mxu0 0.0
        %346 = vmatpush1.msra.mxu0 0.0
        %347 = vmatprep.subr.mxu0 0.0
        %348 = vmatpush1.msra.mxu0 0.0
        %349 = vmatprep.subr.mxu0 0.0
        %350 = vmatpush1.msra.mxu0 0.0
        %351 = vmatprep.subr.mxu0 0.0
        %352 = vmatpush1.msra.mxu0 0.0
        %353 = vmatprep.subr.mxu0 0.0
        %354 = vmatpush1.msra.mxu0 0.0
        %355 = vmatprep.subr.mxu0 0.0
        %356 = vmatpush1.msra.mxu0 0.0
        %357 = vmatprep.subr.mxu0 0.0
        %358 = vmatpush1.msra.mxu0 0.0
        %359 = vmatprep.subr.mxu0 0.0
        %360 = vmatpush1.msra.mxu0 0.0
        %361 = vmatprep.subr.mxu0 0.0
        %362 = vmatpush1.msra.mxu0 0.0
        %363 = vmatprep.subr.mxu0 0.0
        %364 = vmatpush1.msra.mxu0 0.0
        %365 = vmatprep.subr.mxu0 0.0
        %366 = vmatpush1.msra.mxu0 0.0
        %367 = vmatprep.subr.mxu0 0.0
        %368 = vmatpush1.msra.mxu0 0.0
        %369 = vmatprep.subr.mxu0 0.0
        %370 = vmatpush1.msra.mxu0 0.0
        %371 = vmatprep.subr.mxu0 0.0
        %372 = vmatpush1.msra.mxu0 0.0
        %373 = vmatprep.subr.mxu0 0.0
        %374 = vmatpush1.msra.mxu0 0.0
        %375 = vmatprep.subr.mxu0 0.0
        %376 = vmatpush1.msra.mxu0 0.0
        %377 = vmatprep.subr.mxu0 0.0
        %378 = vmatpush1.msra.mxu0 0.0
        %379 = vmatprep.subr.mxu0 0.0
        %380 = vmatpush1.msra.mxu0 0.0
        %381 = vmatprep.subr.mxu0 0.0
        %382 = vmatpush1.msra.mxu0 0.0
        %383 = vmatprep.mubr.f32.mxu0 0.0
        %384 = vmatmul.mubr.f32.gmra.mrb[0].mxu0 %v317
        %v385 = vpop.f32.mrb[0].mxu0
        %v386 = vadd.f32 %v314, %v385
        %v387 = vpop.f32.mrb[0].mxu0
        %388 = vdwg.mxu0
        %vm389 = vcmask 130048
        %390 = vst.msk [vmem:[%s259] sm:$0xff] %vm389, %v386
        %s391 = sand.u32 %s163, 1
        %s392 = scalar_lea.sflag [#allocation3], %s391
        %s393 = sand.u32 %s163, 1
        %s394 = smul.addr %s393, 8
        %s395 = scalar_lea.vmem [#allocation2], %s394
        // Predicated region
        $region41: #{tpu_custom_call.1} parent=39 // pred_check
          %p396 = pneg %p173
        $region42: #{tpu_custom_call.1} parent=39 // pred_check_branch
          %398 = sbr.rel (%p396) target = $region44
        $region43: #{tpu_custom_call.1} parent=39 // pred_region
          %s400 = ssub.s32 128, 128
          %401 = vsyncadd %s392, %s400
          %s402 = sadd.s32 %s24, %s23
          %s403 = smul.addr %s402, 128
          %s404 = scalar_lea.hbm %s5, %s403
          %s406 = sshll.u32 %s395, 4
          %s407 = int_to_ptr.vmem [resolvable:$true] %s406
          %409 = dma.vmem_to_hbm [thread:$0]  %s407, 128, %s404, %s392
        $region44: #{tpu_custom_call.1} parent=39 // pred_fallthru
          _
      $region40: #{tpu_custom_call.1} parent=5 // pred_fallthru
        _
      %p410 = scmp.le.s32.totalorder 2, %s14
      // Predicated region
      $region45: #{tpu_custom_call.1} parent=5 // pred_check
        %p411 = pneg %p410
      $region46: #{tpu_custom_call.1} parent=5 // pred_check_branch
        %413 = sbr.rel (%p411) target = $region48
      $region47: #{tpu_custom_call.1} parent=5 // pred_region
        %s414 = ssub.s32 %s14, 2
        // Predicated region
        $region49: #{tpu_custom_call.1} parent=47 // pred_check
          %p415 = pneg %p179
        $region50: #{tpu_custom_call.1} parent=47 // pred_check_branch
          %417 = sbr.rel (%p415) target = $region52
        $region51: #{tpu_custom_call.1} parent=47 // pred_region
          %s418 = sand.u32 %s164, 1
          %s419 = scalar_lea.sflag [#allocation3], %s418
          %s420 = sand.u32 %s164, 1
          %s421 = smul.addr %s420, 8
          %s422 = scalar_lea.vmem [#allocation2], %s421
          %423 = dma.done %s419, 128
        $region52: #{tpu_custom_call.1} parent=47 // pred_fallthru
          _
      $region48: #{tpu_custom_call.1} parent=5 // pred_fallthru
        _
    $region6: #{tpu_custom_call.1} parent=1 // loop_footer
      %s18 = sadd.s32 1, %s14
    $region7: #{tpu_custom_call.1} parent=1 // loop_footer_branch
      %13 = sbr.rel target = $region3
    $region8: #{tpu_custom_call.1} parent=1 // loop_exit
      _
    %424 = vsyncpa [#allocation3], 1
    %s425 = scalar_lea.sflag [#allocation3], 1
    %426 = vsyncpa %s425, 1

</llo_original>
